<compile_context>
chip_gen: v5e
topology: v5e:2x2
jax: 0.10.0
libtpu: 0.0.40
codegen_flags: <defaults>
</compile_context>

<pallas_src>
import jax
import jax.numpy as jnp
from jax import lax
from jax.experimental import pallas as pl
from jax.experimental.pallas import tpu as pltpu


def _round_up(x: int, m: int) -> int:
    return ((x + m - 1) // m) * m


def _rnn_kernel(x_ref, h0_ref, wxh_ref, whh_ref, bh_ref, wxo_ref, who_ref,
                bo_ref, out_ref, h_out_ref, xh_ref):
    """Single-invocation RNN kernel.

    Shapes (all padded: Bp % 8 == 0, Ip/Hp/Op % 128 == 0):
      x_ref   (S, Bp, Ip)    h0_ref (Bp, Hp)
      wxh_ref (Ip, Hp)       whh_ref (Hp, Hp)    bh_ref (1, Hp)
      wxo_ref (Ip, Op)       who_ref (Hp, Op)    bo_ref (1, Op)
      out_ref (Bp, Op)       h_out_ref (Bp, Hp)
      xh_ref  (S, Bp, Hp)    VMEM scratch for the precomputed projections
    """
    S, Bp, Ip = x_ref.shape
    Hp = whh_ref.shape[0]

    # ---- Phase 1: time-parallel input projection, one big MXU matmul ------
    x_all = x_ref[...]                                            # (S, Bp, Ip)
    xh = jnp.dot(x_all.reshape(S * Bp, Ip), wxh_ref[...],
                 preferred_element_type=jnp.float32)              # (S*Bp, Hp)
    # Bias folded in once here (hoisted out of the recurrence loop).
    xh_ref[...] = xh.reshape(S, Bp, Hp) + bh_ref[...]

    # ---- Phase 2: serial recurrence (only h carried, no per-step stores) --
    whh = whh_ref[...]                                            # hoisted load

    def step(t, h):
        return jnp.tanh(xh_ref[t] +
                        jnp.dot(h, whh, preferred_element_type=jnp.float32))

    # After this loop h_prev == h_{S-2} (or h0 if S == 1).
    h_prev = lax.fori_loop(0, S - 1, step, h0_ref[...], unroll=True)

    # ---- Final step only: i2o uses the PRE-update hidden (h_{S-2}) --------
    out = (jnp.dot(x_all[S - 1], wxo_ref[...],
                   preferred_element_type=jnp.float32)
           + bo_ref[...]
           + jnp.dot(h_prev, who_ref[...],
                     preferred_element_type=jnp.float32))
    h_last = jnp.tanh(xh_ref[S - 1] +
                      jnp.dot(h_prev, whh, preferred_element_type=jnp.float32))

    out_ref[...] = out.astype(out_ref.dtype)
    h_out_ref[...] = h_last.astype(h_out_ref.dtype)


def simple_rnn_forward(inp, hidden, params):
    """Pallas equivalent of SimpleRNN.forward(inp, hidden).

    inp:    (seq, batch, input_size) or (seq, input_size)
    hidden: (batch, hidden_size)
    returns (output_last, hidden_last) with shapes (batch, O), (batch, H)
    """
    if inp.ndim == 2:
        inp = inp[:, None, :]                 # unsqueeze(1), batch=1
    S, B, I = inp.shape
    H = params["w_i2h"].shape[0]
    O = params["w_i2o"].shape[0]

    # Hardware-friendly padded sizes (lane=128, sublane=8).
    Bp = _round_up(B, 8)
    Ip = _round_up(I, 128)
    Hp = _round_up(H, 128)
    Op = _round_up(O, 128)

    # nn.Linear stores weight as (out, in); transpose for y = x @ W^T + b,
    # then split the concat dimension: rows [:I] act on x, rows [I:] on h.
    w_i2h_t = params["w_i2h"].T.astype(jnp.float32)     # (I+H, H)
    w_i2o_t = params["w_i2o"].T.astype(jnp.float32)     # (I+H, O)
    w_xh, w_hh = w_i2h_t[:I], w_i2h_t[I:]
    w_xo, w_ho = w_i2o_t[:I], w_i2o_t[I:]

    def pad2(a, r, c):
        return jnp.pad(a, ((0, r - a.shape[0]), (0, c - a.shape[1])))

    x_p = jnp.pad(inp.astype(jnp.float32),
                  ((0, 0), (0, Bp - B), (0, Ip - I)))
    h0_p = pad2(hidden.astype(jnp.float32), Bp, Hp)
    wxh_p = pad2(w_xh, Ip, Hp)
    whh_p = pad2(w_hh, Hp, Hp)
    wxo_p = pad2(w_xo, Ip, Op)
    who_p = pad2(w_ho, Hp, Op)
    bh_p = jnp.pad(params["b_i2h"].astype(jnp.float32), (0, Hp - H))[None, :]
    bo_p = jnp.pad(params["b_i2o"].astype(jnp.float32), (0, Op - O))[None, :]

    vmem_spec = lambda: pl.BlockSpec(memory_space=pltpu.MemorySpace.VMEM)

    out_p, h_p = pl.pallas_call(
        _rnn_kernel,
        out_shape=(
            jax.ShapeDtypeStruct((Bp, Op), jnp.float32),
            jax.ShapeDtypeStruct((Bp, Hp), jnp.float32),
        ),
        in_specs=[vmem_spec() for _ in range(8)],
        out_specs=(vmem_spec(), vmem_spec()),
        scratch_shapes=[pltpu.VMEM((S, Bp, Hp), jnp.float32)],
    )(x_p, h0_p, wxh_p, whh_p, bh_p, wxo_p, who_p, bo_p)

    # Slice away padding.
    return out_p[:B, :O], h_p[:B, :H]


def init_params(key, input_size, hidden_size, output_size):
    """Deterministic init mimicking nn.Linear's uniform(-1/sqrt(fan_in), ...)."""
    k1, k2, k3, k4, k5 = jax.random.split(key, 5)
    fan_in = input_size + hidden_size
    bound = 1.0 / jnp.sqrt(jnp.float32(fan_in))
    params = {
        "w_i2h": jax.random.uniform(k1, (hidden_size, fan_in), jnp.float32,
                                    -bound, bound),
        "b_i2h": jax.random.uniform(k2, (hidden_size,), jnp.float32,
                                    -bound, bound),
        "w_i2o": jax.random.uniform(k3, (output_size, fan_in), jnp.float32,
                                    -bound, bound),
        "b_i2o": jax.random.uniform(k4, (output_size,), jnp.float32,
                                    -bound, bound),
        # self.actions exists in __init__ but is unused by forward(); kept for parity.
        "actions": 0.01 * jax.random.normal(k5, (4, hidden_size), jnp.float32),
    }
    return params


def reference_forward(inp, hidden, params):
    """Pure-JAX reference of the PyTorch forward(), for validation."""
    if inp.ndim == 2:
        inp = inp[:, None, :]
    out_last = None
    h = hidden
    for i in range(inp.shape[0]):
        x = inp[i]
        combined = jnp.concatenate([x, h], axis=1)
        out_last = combined @ params["w_i2o"].T + params["b_i2o"]
        h = jnp.tanh(combined @ params["w_i2h"].T + params["b_i2h"])
    return out_last, h


if __name__ == "__main__":
    key = jax.random.PRNGKey(0)
    kp, kx, kh = jax.random.split(key, 3)

    seq, batch = 8, 2
    input_size, hidden_size, output_size = 16, 32, 8

    params = init_params(kp, input_size, hidden_size, output_size)
    inp = jax.random.normal(kx, (seq, batch, input_size), jnp.float32)
    hidden0 = jnp.zeros((batch, hidden_size), jnp.float32)  # initHidden analogue

    out, h_last = simple_rnn_forward(inp, hidden0, params)
    out, h_last = jax.block_until_ready(out), jax.block_until_ready(h_last)

    out_ref, h_ref = reference_forward(inp, hidden0, params)
    assert jnp.allclose(out, out_ref, atol=1e-5, rtol=1e-5)
    assert jnp.allclose(h_last, h_ref, atol=1e-5, rtol=1e-5)

    print("KERNEL_OK")
</pallas_src>

<mosaic_0001>
module attributes {stable_mosaic.version = 11 : i64} {
  func.func @_rnn_kernel(%arg0: memref<8x8x128xf32, #tpu.memory_space<vmem>>, %arg1: memref<8x128xf32, #tpu.memory_space<vmem>>, %arg2: memref<128x128xf32, #tpu.memory_space<vmem>>, %arg3: memref<128x128xf32, #tpu.memory_space<vmem>>, %arg4: memref<1x128xf32, #tpu.memory_space<vmem>>, %arg5: memref<128x128xf32, #tpu.memory_space<vmem>>, %arg6: memref<128x128xf32, #tpu.memory_space<vmem>>, %arg7: memref<1x128xf32, #tpu.memory_space<vmem>>, %arg8: memref<8x128xf32, #tpu.memory_space<vmem>>, %arg9: memref<8x128xf32, #tpu.memory_space<vmem>>, %arg10: memref<8x8x128xf32, #tpu.memory_space<vmem>>) attributes {dimension_semantics = [], scalar_prefetch = 0 : i64, scratch_operands = 1 : i64, tpu.core_type = #tpu.core_type<tc>} {
    %c0 = arith.constant 0 : index
    %c0_0 = arith.constant 0 : index
    %c0_1 = arith.constant 0 : index
    %0 = vector.load %arg0[%c0, %c0_0, %c0_1] : memref<8x8x128xf32, #tpu.memory_space<vmem>>, vector<8x8x128xf32>
    %1 = vector.shape_cast %0 : vector<8x8x128xf32> to vector<64x128xf32>
    %c0_2 = arith.constant 0 : index
    %c0_3 = arith.constant 0 : index
    %2 = vector.load %arg2[%c0_2, %c0_3] : memref<128x128xf32, #tpu.memory_space<vmem>>, vector<128x128xf32>
    %cst = arith.constant dense<0.000000e+00> : vector<64x128xf32>
    %3 = tpu.matmul %1, %2, %cst {dimension_numbers = #tpu.dot_dimension_numbers<[1], [0], [0], [1], [0, 0, 1, 1], [], []>} : vector<64x128xf32>, vector<128x128xf32>, vector<64x128xf32> -> vector<64x128xf32>
    %4 = vector.shape_cast %3 : vector<64x128xf32> to vector<8x8x128xf32>
    %c0_4 = arith.constant 0 : index
    %c0_5 = arith.constant 0 : index
    %5 = vector.load %arg4[%c0_4, %c0_5] : memref<1x128xf32, #tpu.memory_space<vmem>>, vector<1x128xf32>
    %6 = vector.shape_cast %5 : vector<1x128xf32> to vector<1x1x128xf32>
    %7 = vector.broadcast %6 : vector<1x1x128xf32> to vector<8x8x128xf32>
    %8 = arith.addf %4, %7 : vector<8x8x128xf32>
    %c0_6 = arith.constant 0 : index
    %c0_7 = arith.constant 0 : index
    %c0_8 = arith.constant 0 : index
    %9 = vector.load %arg10[%c0_6, %c0_7, %c0_8] : memref<8x8x128xf32, #tpu.memory_space<vmem>>, vector<8x8x128xf32>
    tpu.vector_store %arg10[%c0_6, %c0_7, %c0_8], %8 {strides = array<i32>} : memref<8x8x128xf32, #tpu.memory_space<vmem>>, vector<8x8x128xf32>,
    %c0_9 = arith.constant 0 : index
    %c0_10 = arith.constant 0 : index
    %10 = vector.load %arg3[%c0_9, %c0_10] : memref<128x128xf32, #tpu.memory_space<vmem>>, vector<128x128xf32>
    %c0_11 = arith.constant 0 : index
    %c0_12 = arith.constant 0 : index
    %11 = vector.load %arg1[%c0_11, %c0_12] : memref<8x128xf32, #tpu.memory_space<vmem>>, vector<8x128xf32>
    %c0_i32 = arith.constant 0 : i32
    %12 = arith.index_cast %c0_i32 : i32 to index
    %c0_13 = arith.constant 0 : index
    %c0_14 = arith.constant 0 : index
    %13 = vector.load %arg10[%12, %c0_13, %c0_14] : memref<8x8x128xf32, #tpu.memory_space<vmem>>, vector<1x8x128xf32>
    %14 = vector.shape_cast %13 : vector<1x8x128xf32> to vector<8x128xf32>
    %cst_15 = arith.constant dense<0.000000e+00> : vector<8x128xf32>
    %15 = tpu.matmul %11, %10, %cst_15 {dimension_numbers = #tpu.dot_dimension_numbers<[1], [0], [0], [1], [0, 0, 1, 1], [], []>} : vector<8x128xf32>, vector<128x128xf32>, vector<8x128xf32> -> vector<8x128xf32>
    %16 = arith.addf %14, %15 : vector<8x128xf32>
    %17 = math.tanh %16 : vector<8x128xf32>
    %c1_i32 = arith.constant 1 : i32
    %18 = arith.index_cast %c1_i32 : i32 to index
    %c0_16 = arith.constant 0 : index
    %c0_17 = arith.constant 0 : index
    %19 = vector.load %arg10[%18, %c0_16, %c0_17] : memref<8x8x128xf32, #tpu.memory_space<vmem>>, vector<1x8x128xf32>
    %20 = vector.shape_cast %19 : vector<1x8x128xf32> to vector<8x128xf32>
    %cst_18 = arith.constant dense<0.000000e+00> : vector<8x128xf32>
    %21 = tpu.matmul %17, %10, %cst_18 {dimension_numbers = #tpu.dot_dimension_numbers<[1], [0], [0], [1], [0, 0, 1, 1], [], []>} : vector<8x128xf32>, vector<128x128xf32>, vector<8x128xf32> -> vector<8x128xf32>
    %22 = arith.addf %20, %21 : vector<8x128xf32>
    %23 = math.tanh %22 : vector<8x128xf32>
    %c2_i32 = arith.constant 2 : i32
    %24 = arith.index_cast %c2_i32 : i32 to index
    %c0_19 = arith.constant 0 : index
    %c0_20 = arith.constant 0 : index
    %25 = vector.load %arg10[%24, %c0_19, %c0_20] : memref<8x8x128xf32, #tpu.memory_space<vmem>>, vector<1x8x128xf32>
    %26 = vector.shape_cast %25 : vector<1x8x128xf32> to vector<8x128xf32>
    %cst_21 = arith.constant dense<0.000000e+00> : vector<8x128xf32>
    %27 = tpu.matmul %23, %10, %cst_21 {dimension_numbers = #tpu.dot_dimension_numbers<[1], [0], [0], [1], [0, 0, 1, 1], [], []>} : vector<8x128xf32>, vector<128x128xf32>, vector<8x128xf32> -> vector<8x128xf32>
    %28 = arith.addf %26, %27 : vector<8x128xf32>
    %29 = math.tanh %28 : vector<8x128xf32>
    %c3_i32 = arith.constant 3 : i32
    %30 = arith.index_cast %c3_i32 : i32 to index
    %c0_22 = arith.constant 0 : index
    %c0_23 = arith.constant 0 : index
    %31 = vector.load %arg10[%30, %c0_22, %c0_23] : memref<8x8x128xf32, #tpu.memory_space<vmem>>, vector<1x8x128xf32>
    %32 = vector.shape_cast %31 : vector<1x8x128xf32> to vector<8x128xf32>
    %cst_24 = arith.constant dense<0.000000e+00> : vector<8x128xf32>
    %33 = tpu.matmul %29, %10, %cst_24 {dimension_numbers = #tpu.dot_dimension_numbers<[1], [0], [0], [1], [0, 0, 1, 1], [], []>} : vector<8x128xf32>, vector<128x128xf32>, vector<8x128xf32> -> vector<8x128xf32>
    %34 = arith.addf %32, %33 : vector<8x128xf32>
    %35 = math.tanh %34 : vector<8x128xf32>
    %c4_i32 = arith.constant 4 : i32
    %36 = arith.index_cast %c4_i32 : i32 to index
    %c0_25 = arith.constant 0 : index
    %c0_26 = arith.constant 0 : index
    %37 = vector.load %arg10[%36, %c0_25, %c0_26] : memref<8x8x128xf32, #tpu.memory_space<vmem>>, vector<1x8x128xf32>
    %38 = vector.shape_cast %37 : vector<1x8x128xf32> to vector<8x128xf32>
    %cst_27 = arith.constant dense<0.000000e+00> : vector<8x128xf32>
    %39 = tpu.matmul %35, %10, %cst_27 {dimension_numbers = #tpu.dot_dimension_numbers<[1], [0], [0], [1], [0, 0, 1, 1], [], []>} : vector<8x128xf32>, vector<128x128xf32>, vector<8x128xf32> -> vector<8x128xf32>
    %40 = arith.addf %38, %39 : vector<8x128xf32>
    %41 = math.tanh %40 : vector<8x128xf32>
    %c5_i32 = arith.constant 5 : i32
    %42 = arith.index_cast %c5_i32 : i32 to index
    %c0_28 = arith.constant 0 : index
    %c0_29 = arith.constant 0 : index
    %43 = vector.load %arg10[%42, %c0_28, %c0_29] : memref<8x8x128xf32, #tpu.memory_space<vmem>>, vector<1x8x128xf32>
    %44 = vector.shape_cast %43 : vector<1x8x128xf32> to vector<8x128xf32>
    %cst_30 = arith.constant dense<0.000000e+00> : vector<8x128xf32>
    %45 = tpu.matmul %41, %10, %cst_30 {dimension_numbers = #tpu.dot_dimension_numbers<[1], [0], [0], [1], [0, 0, 1, 1], [], []>} : vector<8x128xf32>, vector<128x128xf32>, vector<8x128xf32> -> vector<8x128xf32>
    %46 = arith.addf %44, %45 : vector<8x128xf32>
    %47 = math.tanh %46 : vector<8x128xf32>
    %c6_i32 = arith.constant 6 : i32
    %48 = arith.index_cast %c6_i32 : i32 to index
    %c0_31 = arith.constant 0 : index
    %c0_32 = arith.constant 0 : index
    %49 = vector.load %arg10[%48, %c0_31, %c0_32] : memref<8x8x128xf32, #tpu.memory_space<vmem>>, vector<1x8x128xf32>
    %50 = vector.shape_cast %49 : vector<1x8x128xf32> to vector<8x128xf32>
    %cst_33 = arith.constant dense<0.000000e+00> : vector<8x128xf32>
    %51 = tpu.matmul %47, %10, %cst_33 {dimension_numbers = #tpu.dot_dimension_numbers<[1], [0], [0], [1], [0, 0, 1, 1], [], []>} : vector<8x128xf32>, vector<128x128xf32>, vector<8x128xf32> -> vector<8x128xf32>
    %52 = arith.addf %50, %51 : vector<8x128xf32>
    %53 = math.tanh %52 : vector<8x128xf32>
    %c7_i32 = arith.constant 7 : i32
    %54 = vector.extract_strided_slice %0 {offsets = [7, 0, 0], sizes = [1, 8, 128], strides = [1, 1, 1]} : vector<8x8x128xf32> to vector<1x8x128xf32>
    %55 = vector.shape_cast %54 : vector<1x8x128xf32> to vector<8x128xf32>
    %c0_34 = arith.constant 0 : index
    %c0_35 = arith.constant 0 : index
    %56 = vector.load %arg5[%c0_34, %c0_35] : memref<128x128xf32, #tpu.memory_space<vmem>>, vector<128x128xf32>
    %cst_36 = arith.constant dense<0.000000e+00> : vector<8x128xf32>
    %57 = tpu.matmul %55, %56, %cst_36 {dimension_numbers = #tpu.dot_dimension_numbers<[1], [0], [0], [1], [0, 0, 1, 1], [], []>} : vector<8x128xf32>, vector<128x128xf32>, vector<8x128xf32> -> vector<8x128xf32>
    %c0_37 = arith.constant 0 : index
    %c0_38 = arith.constant 0 : index
    %58 = vector.load %arg7[%c0_37, %c0_38] : memref<1x128xf32, #tpu.memory_space<vmem>>, vector<1x128xf32>
    %59 = vector.broadcast %58 : vector<1x128xf32> to vector<8x128xf32>
    %60 = arith.addf %57, %59 : vector<8x128xf32>
    %c0_39 = arith.constant 0 : index
    %c0_40 = arith.constant 0 : index
    %61 = vector.load %arg6[%c0_39, %c0_40] : memref<128x128xf32, #tpu.memory_space<vmem>>, vector<128x128xf32>
    %cst_41 = arith.constant dense<0.000000e+00> : vector<8x128xf32>
    %62 = tpu.matmul %53, %61, %cst_41 {dimension_numbers = #tpu.dot_dimension_numbers<[1], [0], [0], [1], [0, 0, 1, 1], [], []>} : vector<8x128xf32>, vector<128x128xf32>, vector<8x128xf32> -> vector<8x128xf32>
    %63 = arith.addf %60, %62 : vector<8x128xf32>
    %c7 = arith.constant 7 : index
    %c0_42 = arith.constant 0 : index
    %c0_43 = arith.constant 0 : index
    %64 = vector.load %arg10[%c7, %c0_42, %c0_43] : memref<8x8x128xf32, #tpu.memory_space<vmem>>, vector<1x8x128xf32>
    %65 = vector.shape_cast %64 : vector<1x8x128xf32> to vector<8x128xf32>
    %cst_44 = arith.constant dense<0.000000e+00> : vector<8x128xf32>
    %66 = tpu.matmul %53, %10, %cst_44 {dimension_numbers = #tpu.dot_dimension_numbers<[1], [0], [0], [1], [0, 0, 1, 1], [], []>} : vector<8x128xf32>, vector<128x128xf32>, vector<8x128xf32> -> vector<8x128xf32>
    %67 = arith.addf %65, %66 : vector<8x128xf32>
    %68 = math.tanh %67 : vector<8x128xf32>
    %c0_45 = arith.constant 0 : index
    %c0_46 = arith.constant 0 : index
    %69 = vector.load %arg8[%c0_45, %c0_46] : memref<8x128xf32, #tpu.memory_space<vmem>>, vector<8x128xf32>
    tpu.vector_store %arg8[%c0_45, %c0_46], %63 {strides = array<i32>} : memref<8x128xf32, #tpu.memory_space<vmem>>, vector<8x128xf32>,
    %c0_47 = arith.constant 0 : index
    %c0_48 = arith.constant 0 : index
    %70 = vector.load %arg9[%c0_47, %c0_48] : memref<8x128xf32, #tpu.memory_space<vmem>>, vector<8x128xf32>
    tpu.vector_store %arg9[%c0_47, %c0_48], %68 {strides = array<i32>} : memref<8x128xf32, #tpu.memory_space<vmem>>, vector<8x128xf32>,
    return
  }
}

</mosaic_0001>

<llo_original>
// kernel: tpu_custom_call.1
$region0: #{tpu_custom_call.1}
  #allocation0 [shape = 'u32[]', space=smem, size = 0x4, offset = 0x4, fixed_abs, tag = 'smem constant byte address 0x4 - core index']
  #allocation1 [shape = 'u32[72,128]{1,0:T(1,128)}', space=vmem, size = 0x9000, scoped, tag = 'internal scratch']
  #allocation2 [shape = 'f32[8,8,128]{2,1,0:T(8,128)}', space=vmem, size = 0x8000, scoped, tag = 'scratch operand']
  %s0 = inlined_call_operand.hbm [shape: f32[8,8,128], index: 0, kind: input, shape index: {}]
  %s1 = inlined_call_operand.hbm [shape: f32[8,128], index: 1, kind: input, shape index: {}]
  %s2 = inlined_call_operand.hbm [shape: f32[128,128], index: 2, kind: input, shape index: {}]
  %s3 = inlined_call_operand.hbm [shape: f32[128,128], index: 3, kind: input, shape index: {}]
  %s4 = inlined_call_operand.vmem [shape: f32[1,128], index: 4, kind: input, shape index: {}]
  %s5 = inlined_call_operand.hbm [shape: f32[128,128], index: 5, kind: input, shape index: {}]
  %s6 = inlined_call_operand.hbm [shape: f32[128,128], index: 6, kind: input, shape index: {}]
  %s7 = inlined_call_operand.vmem [shape: f32[1,128], index: 7, kind: input, shape index: {}]
  %s8 = inlined_call_operand.hbm [shape: f32[8,128], index: 8, kind: output, shape index: {0}]
  %s9 = inlined_call_operand.hbm [shape: f32[8,128], index: 9, kind: output, shape index: {1}]
  %10 = xla_tuple %s8, %s9
  %s11 = sld [smem:[#allocation0]]
  $region74: #{tpu_custom_call.1} parent=0
    _
  %s13 = ssub.s32 1, %s11
  %s14 = scalar_select 0, %s13, %s11
  $region1: #{tpu_custom_call.1} parent=0
    #allocation3 [shape = 'u8[32768]{0}', space=vmem, size = 0x8000, scoped, tag = 'input window, operand 0, single buffered']
    #allocation4 [shape = 's32[1]{0}', space=sflag, size = 0x4, scoped, tag = 'scoped memory for tpu_custom_call.1']
    #allocation5 [shape = 's32[1]{0}', space=sflag, size = 0x4, scoped, tag = 'scoped memory for tpu_custom_call.1']
    #allocation6 [shape = 'u8[4096]{0}', space=vmem, size = 0x1000, scoped, tag = 'input window, operand 1, single buffered']
    #allocation7 [shape = 's32[1]{0}', space=sflag, size = 0x4, scoped, tag = 'scoped memory for tpu_custom_call.1']
    #allocation8 [shape = 'u8[65536]{0}', space=vmem, size = 0x10000, scoped, tag = 'input window, operand 2, single buffered']
    #allocation9 [shape = 'u8[65536]{0}', space=vmem, size = 0x10000, scoped, tag = 'input window, operand 3, single buffered']
    #allocation10 [shape = 's32[1]{0}', space=sflag, size = 0x4, scoped, tag = 'scoped memory for tpu_custom_call.1']
    #allocation11 [shape = 'u8[65536]{0}', space=vmem, size = 0x10000, scoped, tag = 'input window, operand 5, single buffered']
    #allocation12 [shape = 'u8[65536]{0}', space=vmem, size = 0x10000, scoped, tag = 'input window, operand 6, single buffered']
    #allocation13 [shape = 's32[1]{0}', space=sflag, size = 0x4, scoped, tag = 'scoped memory for tpu_custom_call.1']
    #allocation14 [shape = 'u8[4096]{0}', space=vmem, size = 0x1000, scoped, tag = 'output window, operand 0, single buffered']
    #allocation15 [shape = 'u8[4096]{0}', space=vmem, size = 0x1000, scoped, tag = 'output window, operand 1, single buffered']
    #allocation16 [shape = 's32[1]{0}', space=sflag, size = 0x4, scoped, tag = 'scoped memory for tpu_custom_call.1']
    %15 = vsyncpa [#allocation4], 0
    %16 = vsyncpa [#allocation7], 0
    %17 = vsyncpa [#allocation10], 0
    %18 = vsyncpa [#allocation13], 0
    %19 = vsyncpa [#allocation5], 0
    %20 = vsyncpa [#allocation16], 0
    // Predicated region
    $region2: #{tpu_custom_call.1} parent=1 // pred_check
      _
    $region3: #{tpu_custom_call.1} parent=1 // pred_check_branch
      %22 = sbr.rel (0) target = $region5
    $region4: #{tpu_custom_call.1} parent=1 // pred_region
      %24 = vsyncadd [#allocation4], 0
      %s25 = sshll.u32 %s0, 4
      %s26 = int_to_ptr.hbm [resolvable:$true] %s25
      %s27 = sshll.u32 [#allocation3], 4
      %s28 = int_to_ptr.vmem [resolvable:$true] %s27
      %33 = dma.hbm_to_vmem [thread:$0]  %s26, 1024, %s28, [#allocation4], 128, 128, 8
    $region5: #{tpu_custom_call.1} parent=1 // pred_fallthru
      _
    // Predicated region
    $region6: #{tpu_custom_call.1} parent=1 // pred_check
      _
    $region7: #{tpu_custom_call.1} parent=1 // pred_check_branch
      %35 = sbr.rel (0) target = $region9
    $region8: #{tpu_custom_call.1} parent=1 // pred_region
      %37 = vsyncadd [#allocation7], 0
      %s39 = sshll.u32 %s1, 4
      %s40 = int_to_ptr.hbm [resolvable:$true] %s39
      %s41 = sshll.u32 [#allocation6], 4
      %s42 = int_to_ptr.vmem [resolvable:$true] %s41
      %44 = dma.hbm_to_vmem [thread:$0]  %s40, 128, %s42, [#allocation7]
    $region9: #{tpu_custom_call.1} parent=1 // pred_fallthru
      _
    // Predicated region
    $region10: #{tpu_custom_call.1} parent=1 // pred_check
      _
    $region11: #{tpu_custom_call.1} parent=1 // pred_check_branch
      %46 = sbr.rel (0) target = $region13
    $region12: #{tpu_custom_call.1} parent=1 // pred_region
      %48 = vsyncadd [#allocation7], 0
      %s49 = sshll.u32 %s2, 4
      %s50 = int_to_ptr.hbm [resolvable:$true] %s49
      %s51 = sshll.u32 [#allocation8], 4
      %s52 = int_to_ptr.vmem [resolvable:$true] %s51
      %57 = dma.hbm_to_vmem [thread:$0]  %s50, 2048, %s52, [#allocation7], 128, 128, 8
    $region13: #{tpu_custom_call.1} parent=1 // pred_fallthru
      _
    // Predicated region
    $region14: #{tpu_custom_call.1} parent=1 // pred_check
      _
    $region15: #{tpu_custom_call.1} parent=1 // pred_check_branch
      %59 = sbr.rel (0) target = $region17
    $region16: #{tpu_custom_call.1} parent=1 // pred_region
      %61 = vsyncadd [#allocation10], 0
      %s62 = sshll.u32 %s3, 4
      %s63 = int_to_ptr.hbm [resolvable:$true] %s62
      %s64 = sshll.u32 [#allocation9], 4
      %s65 = int_to_ptr.vmem [resolvable:$true] %s64
      %70 = dma.hbm_to_vmem [thread:$0]  %s63, 2048, %s65, [#allocation10], 128, 128, 8
    $region17: #{tpu_custom_call.1} parent=1 // pred_fallthru
      _
    // Predicated region
    $region18: #{tpu_custom_call.1} parent=1 // pred_check
      _
    $region19: #{tpu_custom_call.1} parent=1 // pred_check_branch
      %72 = sbr.rel (0) target = $region21
    $region20: #{tpu_custom_call.1} parent=1 // pred_region
      _
    $region21: #{tpu_custom_call.1} parent=1 // pred_fallthru
      _
    // Predicated region
    $region22: #{tpu_custom_call.1} parent=1 // pred_check
      _
    $region23: #{tpu_custom_call.1} parent=1 // pred_check_branch
      %74 = sbr.rel (0) target = $region25
    $region24: #{tpu_custom_call.1} parent=1 // pred_region
      %76 = vsyncadd [#allocation10], 0
      %s77 = sshll.u32 %s5, 4
      %s78 = int_to_ptr.hbm [resolvable:$true] %s77
      %s79 = sshll.u32 [#allocation11], 4
      %s80 = int_to_ptr.vmem [resolvable:$true] %s79
      %85 = dma.hbm_to_vmem [thread:$0]  %s78, 2048, %s80, [#allocation10], 128, 128, 8
    $region25: #{tpu_custom_call.1} parent=1 // pred_fallthru
      _
    // Predicated region
    $region26: #{tpu_custom_call.1} parent=1 // pred_check
      _
    $region27: #{tpu_custom_call.1} parent=1 // pred_check_branch
      %87 = sbr.rel (0) target = $region29
    $region28: #{tpu_custom_call.1} parent=1 // pred_region
      %89 = vsyncadd [#allocation13], 0
      %s90 = sshll.u32 %s6, 4
      %s91 = int_to_ptr.hbm [resolvable:$true] %s90
      %s92 = sshll.u32 [#allocation12], 4
      %s93 = int_to_ptr.vmem [resolvable:$true] %s92
      %98 = dma.hbm_to_vmem [thread:$0]  %s91, 2048, %s93, [#allocation13], 128, 128, 8
    $region29: #{tpu_custom_call.1} parent=1 // pred_fallthru
      _
    // Predicated region
    $region30: #{tpu_custom_call.1} parent=1 // pred_check
      _
    $region31: #{tpu_custom_call.1} parent=1 // pred_check_branch
      %100 = sbr.rel (0) target = $region33
    $region32: #{tpu_custom_call.1} parent=1 // pred_region
      _
    $region33: #{tpu_custom_call.1} parent=1 // pred_fallthru
      _
    // Predicated region
    $region34: #{tpu_custom_call.1} parent=1 // pred_check
      _
    $region35: #{tpu_custom_call.1} parent=1 // pred_check_branch
      %102 = sbr.rel (0) target = $region37
    $region36: #{tpu_custom_call.1} parent=1 // pred_region
      %104 = dma.done [#allocation4], 1024
    $region37: #{tpu_custom_call.1} parent=1 // pred_fallthru
      _
    // Predicated region
    $region38: #{tpu_custom_call.1} parent=1 // pred_check
      _
    $region39: #{tpu_custom_call.1} parent=1 // pred_check_branch
      %106 = sbr.rel (0) target = $region41
    $region40: #{tpu_custom_call.1} parent=1 // pred_region
      %108 = dma.done [#allocation7], 128
    $region41: #{tpu_custom_call.1} parent=1 // pred_fallthru
      _
    // Predicated region
    $region42: #{tpu_custom_call.1} parent=1 // pred_check
      _
    $region43: #{tpu_custom_call.1} parent=1 // pred_check_branch
      %110 = sbr.rel (0) target = $region45
    $region44: #{tpu_custom_call.1} parent=1 // pred_region
      %112 = dma.done [#allocation7], 2048
    $region45: #{tpu_custom_call.1} parent=1 // pred_fallthru
      _
    // Predicated region
    $region46: #{tpu_custom_call.1} parent=1 // pred_check
      _
    $region47: #{tpu_custom_call.1} parent=1 // pred_check_branch
      %114 = sbr.rel (0) target = $region49
    $region48: #{tpu_custom_call.1} parent=1 // pred_region
      %116 = dma.done [#allocation10], 2048
    $region49: #{tpu_custom_call.1} parent=1 // pred_fallthru
      _
    // Predicated region
    $region50: #{tpu_custom_call.1} parent=1 // pred_check
      _
    $region51: #{tpu_custom_call.1} parent=1 // pred_check_branch
      %118 = sbr.rel (0) target = $region53
    $region52: #{tpu_custom_call.1} parent=1 // pred_region
      %120 = dma.done [#allocation10], 2048
    $region53: #{tpu_custom_call.1} parent=1 // pred_fallthru
      _
    // Predicated region
    $region54: #{tpu_custom_call.1} parent=1 // pred_check
      _
    $region55: #{tpu_custom_call.1} parent=1 // pred_check_branch
      %122 = sbr.rel (0) target = $region57
    $region56: #{tpu_custom_call.1} parent=1 // pred_region
      %124 = dma.done [#allocation13], 2048
    $region57: #{tpu_custom_call.1} parent=1 // pred_fallthru
      _
    %v125 = vld [vmem:[#allocation3] sm:$0xff]
    %v126 = vld [vmem:[#allocation3 + $0x8] sm:$0xff]
    %v127 = vld [vmem:[#allocation3 + $0x10] sm:$0xff]
    %v128 = vld [vmem:[#allocation3 + $0x18] sm:$0xff]
    %v129 = vld [vmem:[#allocation3 + $0x20] sm:$0xff]
    %v130 = vld [vmem:[#allocation3 + $0x28] sm:$0xff]
    %v131 = vld [vmem:[#allocation3 + $0x30] sm:$0xff]
    %v132 = vld [vmem:[#allocation3 + $0x38] sm:$0xff]
    %v133 = vld [vmem:[#allocation8] sm:$0xff]
    %v134 = vld [vmem:[#allocation8 + $0x8] sm:$0xff]
    %v135 = vld [vmem:[#allocation8 + $0x10] sm:$0xff]
    %v136 = vld [vmem:[#allocation8 + $0x18] sm:$0xff]
    %v137 = vld [vmem:[#allocation8 + $0x20] sm:$0xff]
    %v138 = vld [vmem:[#allocation8 + $0x28] sm:$0xff]
    %v139 = vld [vmem:[#allocation8 + $0x30] sm:$0xff]
    %v140 = vld [vmem:[#allocation8 + $0x38] sm:$0xff]
    %v141 = vld [vmem:[#allocation8 + $0x40] sm:$0xff]
    %v142 = vld [vmem:[#allocation8 + $0x48] sm:$0xff]
    %v143 = vld [vmem:[#allocation8 + $0x50] sm:$0xff]
    %v144 = vld [vmem:[#allocation8 + $0x58] sm:$0xff]
    %v145 = vld [vmem:[#allocation8 + $0x60] sm:$0xff]
    %v146 = vld [vmem:[#allocation8 + $0x68] sm:$0xff]
    %v147 = vld [vmem:[#allocation8 + $0x70] sm:$0xff]
    %v148 = vld [vmem:[#allocation8 + $0x78] sm:$0xff]
    %149 = vmatpush.msra.mxu0 %v148
    %150 = vmatpush.msra.mxu0 %v147
    %151 = vmatpush.msra.mxu0 %v146
    %152 = vmatpush.msra.mxu0 %v145
    %153 = vmatpush.msra.mxu0 %v144
    %154 = vmatpush.msra.mxu0 %v143
    %155 = vmatpush.msra.mxu0 %v142
    %156 = vmatpush.msra.mxu0 %v141
    %157 = vmatpush.msra.mxu0 %v140
    %158 = vmatpush.msra.mxu0 %v139
    %159 = vmatpush.msra.mxu0 %v138
    %160 = vmatpush.msra.mxu0 %v137
    %161 = vmatpush.msra.mxu0 %v136
    %162 = vmatpush.msra.mxu0 %v135
    %163 = vmatpush.msra.mxu0 %v134
    %164 = vmatpush.msra.mxu0 %v133
    %165 = vmatmul.f32.gmra.mxu0 %v125
    %v166 = vpop.f32.mrf.mxu0
    %v167 = vadd.f32 0.0, %v166
    %168 = vmatmul.f32.gmra.mxu0 %v126
    %v169 = vpop.f32.mrf.mxu0
    %v170 = vadd.f32 0.0, %v169
    %171 = vmatmul.f32.gmra.mxu0 %v127
    %v172 = vpop.f32.mrf.mxu0
    %v173 = vadd.f32 0.0, %v172
    %174 = vmatmul.f32.gmra.mxu0 %v128
    %v175 = vpop.f32.mrf.mxu0
    %v176 = vadd.f32 0.0, %v175
    %177 = vmatmul.f32.gmra.mxu0 %v129
    %v178 = vpop.f32.mrf.mxu0
    %v179 = vadd.f32 0.0, %v178
    %180 = vmatmul.f32.gmra.mxu0 %v130
    %v181 = vpop.f32.mrf.mxu0
    %v182 = vadd.f32 0.0, %v181
    %183 = vmatmul.f32.gmra.mxu0 %v131
    %v184 = vpop.f32.mrf.mxu0
    %v185 = vadd.f32 0.0, %v184
    %186 = vmatmul.f32.gmra.mxu0 %v132
    %v187 = vpop.f32.mrf.mxu0
    %v188 = vadd.f32 0.0, %v187
    %189 = vdwg.mxu0
    %v190 = vld [vmem:[%s4] sm:$0x1]
    %v192 = vperm.slane %v190, 0
    %v194 = vadd.f32 %v167, %v192
    %v195 = vadd.f32 %v170, %v192
    %v196 = vadd.f32 %v173, %v192
    %v197 = vadd.f32 %v176, %v192
    %v198 = vadd.f32 %v179, %v192
    %v199 = vadd.f32 %v182, %v192
    %v200 = vadd.f32 %v185, %v192
    %v201 = vadd.f32 %v188, %v192
    %202 = vst [vmem:[#allocation2] sm:$0xff] %v194
    %203 = vst [vmem:[#allocation2 + $0x8] sm:$0xff] %v195
    %204 = vst [vmem:[#allocation2 + $0x10] sm:$0xff] %v196
    %205 = vst [vmem:[#allocation2 + $0x18] sm:$0xff] %v197
    %206 = vst [vmem:[#allocation2 + $0x20] sm:$0xff] %v198
    %207 = vst [vmem:[#allocation2 + $0x28] sm:$0xff] %v199
    %208 = vst [vmem:[#allocation2 + $0x30] sm:$0xff] %v200
    %209 = vst [vmem:[#allocation2 + $0x38] sm:$0xff] %v201
    %v210 = vld [vmem:[#allocation9] sm:$0xff]
    %v211 = vld [vmem:[#allocation9 + $0x8] sm:$0xff]
    %v212 = vld [vmem:[#allocation9 + $0x10] sm:$0xff]
    %v213 = vld [vmem:[#allocation9 + $0x18] sm:$0xff]
    %v214 = vld [vmem:[#allocation9 + $0x20] sm:$0xff]
    %v215 = vld [vmem:[#allocation9 + $0x28] sm:$0xff]
    %v216 = vld [vmem:[#allocation9 + $0x30] sm:$0xff]
    %v217 = vld [vmem:[#allocation9 + $0x38] sm:$0xff]
    %v218 = vld [vmem:[#allocation9 + $0x40] sm:$0xff]
    %v219 = vld [vmem:[#allocation9 + $0x48] sm:$0xff]
    %v220 = vld [vmem:[#allocation9 + $0x50] sm:$0xff]
    %v221 = vld [vmem:[#allocation9 + $0x58] sm:$0xff]
    %v222 = vld [vmem:[#allocation9 + $0x60] sm:$0xff]
    %v223 = vld [vmem:[#allocation9 + $0x68] sm:$0xff]
    %v224 = vld [vmem:[#allocation9 + $0x70] sm:$0xff]
    %v225 = vld [vmem:[#allocation9 + $0x78] sm:$0xff]
    %v226 = vld [vmem:[#allocation6] sm:$0xff]
    %v227 = vld [vmem:[#allocation2] sm:$0xff]
    %228 = vmatpush.msra.mxu0 %v225
    %229 = vmatpush.msra.mxu0 %v224
    %230 = vmatpush.msra.mxu0 %v223
    %231 = vmatpush.msra.mxu0 %v222
    %232 = vmatpush.msra.mxu0 %v221
    %233 = vmatpush.msra.mxu0 %v220
    %234 = vmatpush.msra.mxu0 %v219
    %235 = vmatpush.msra.mxu0 %v218
    %236 = vmatpush.msra.mxu0 %v217
    %237 = vmatpush.msra.mxu0 %v216
    %238 = vmatpush.msra.mxu0 %v215
    %239 = vmatpush.msra.mxu0 %v214
    %240 = vmatpush.msra.mxu0 %v213
    %241 = vmatpush.msra.mxu0 %v212
    %242 = vmatpush.msra.mxu0 %v211
    %243 = vmatpush.msra.mxu0 %v210
    %244 = vmatmul.f32.gmra.mxu0 %v226
    %v245 = vpop.f32.mrf.mxu0
    %v246 = vadd.f32 0.0, %v245
    %247 = vdwg.mxu0
    %v248 = vadd.f32 %v227, %v246
    %v249 = vtanh.pop %v248
    %s250 = scalar_lea.vmem [#allocation2], 8
    %v251 = vld [vmem:[%s250] sm:$0xff]
    %252 = vmatpush.msra.mxu0 %v225
    %253 = vmatpush.msra.mxu0 %v224
    %254 = vmatpush.msra.mxu0 %v223
    %255 = vmatpush.msra.mxu0 %v222
    %256 = vmatpush.msra.mxu0 %v221
    %257 = vmatpush.msra.mxu0 %v220
    %258 = vmatpush.msra.mxu0 %v219
    %259 = vmatpush.msra.mxu0 %v218
    %260 = vmatpush.msra.mxu0 %v217
    %261 = vmatpush.msra.mxu0 %v216
    %262 = vmatpush.msra.mxu0 %v215
    %263 = vmatpush.msra.mxu0 %v214
    %264 = vmatpush.msra.mxu0 %v213
    %265 = vmatpush.msra.mxu0 %v212
    %266 = vmatpush.msra.mxu0 %v211
    %267 = vmatpush.msra.mxu0 %v210
    %268 = vmatmul.f32.gmra.mxu0 %v249
    %v269 = vpop.f32.mrf.mxu0
    %v270 = vadd.f32 0.0, %v269
    %271 = vdwg.mxu0
    %v272 = vadd.f32 %v251, %v270
    %v273 = vtanh.pop %v272
    %s274 = scalar_lea.vmem [#allocation2], 16
    %v275 = vld [vmem:[%s274] sm:$0xff]
    %276 = vmatpush.msra.mxu0 %v225
    %277 = vmatpush.msra.mxu0 %v224
    %278 = vmatpush.msra.mxu0 %v223
    %279 = vmatpush.msra.mxu0 %v222
    %280 = vmatpush.msra.mxu0 %v221
    %281 = vmatpush.msra.mxu0 %v220
    %282 = vmatpush.msra.mxu0 %v219
    %283 = vmatpush.msra.mxu0 %v218
    %284 = vmatpush.msra.mxu0 %v217
    %285 = vmatpush.msra.mxu0 %v216
    %286 = vmatpush.msra.mxu0 %v215
    %287 = vmatpush.msra.mxu0 %v214
    %288 = vmatpush.msra.mxu0 %v213
    %289 = vmatpush.msra.mxu0 %v212
    %290 = vmatpush.msra.mxu0 %v211
    %291 = vmatpush.msra.mxu0 %v210
    %292 = vmatmul.f32.gmra.mxu0 %v273
    %v293 = vpop.f32.mrf.mxu0
    %v294 = vadd.f32 0.0, %v293
    %295 = vdwg.mxu0
    %v296 = vadd.f32 %v275, %v294
    %v297 = vtanh.pop %v296
    %s298 = scalar_lea.vmem [#allocation2], 24
    %v299 = vld [vmem:[%s298] sm:$0xff]
    %300 = vmatpush.msra.mxu0 %v225
    %301 = vmatpush.msra.mxu0 %v224
    %302 = vmatpush.msra.mxu0 %v223
    %303 = vmatpush.msra.mxu0 %v222
    %304 = vmatpush.msra.mxu0 %v221
    %305 = vmatpush.msra.mxu0 %v220
    %306 = vmatpush.msra.mxu0 %v219
    %307 = vmatpush.msra.mxu0 %v218
    %308 = vmatpush.msra.mxu0 %v217
    %309 = vmatpush.msra.mxu0 %v216
    %310 = vmatpush.msra.mxu0 %v215
    %311 = vmatpush.msra.mxu0 %v214
    %312 = vmatpush.msra.mxu0 %v213
    %313 = vmatpush.msra.mxu0 %v212
    %314 = vmatpush.msra.mxu0 %v211
    %315 = vmatpush.msra.mxu0 %v210
    %316 = vmatmul.f32.gmra.mxu0 %v297
    %v317 = vpop.f32.mrf.mxu0
    %v318 = vadd.f32 0.0, %v317
    %319 = vdwg.mxu0
    %v320 = vadd.f32 %v299, %v318
    %v321 = vtanh.pop %v320
    %s322 = scalar_lea.vmem [#allocation2], 32
    %v323 = vld [vmem:[%s322] sm:$0xff]
    %324 = vmatpush.msra.mxu0 %v225
    %325 = vmatpush.msra.mxu0 %v224
    %326 = vmatpush.msra.mxu0 %v223
    %327 = vmatpush.msra.mxu0 %v222
    %328 = vmatpush.msra.mxu0 %v221
    %329 = vmatpush.msra.mxu0 %v220
    %330 = vmatpush.msra.mxu0 %v219
    %331 = vmatpush.msra.mxu0 %v218
    %332 = vmatpush.msra.mxu0 %v217
    %333 = vmatpush.msra.mxu0 %v216
    %334 = vmatpush.msra.mxu0 %v215
    %335 = vmatpush.msra.mxu0 %v214
    %336 = vmatpush.msra.mxu0 %v213
    %337 = vmatpush.msra.mxu0 %v212
    %338 = vmatpush.msra.mxu0 %v211
    %339 = vmatpush.msra.mxu0 %v210
    %340 = vmatmul.f32.gmra.mxu0 %v321
    %v341 = vpop.f32.mrf.mxu0
    %v342 = vadd.f32 0.0, %v341
    %343 = vdwg.mxu0
    %v344 = vadd.f32 %v323, %v342
    %v345 = vtanh.pop %v344
    %s346 = scalar_lea.vmem [#allocation2], 40
    %v347 = vld [vmem:[%s346] sm:$0xff]
    %348 = vmatpush.msra.mxu0 %v225
    %349 = vmatpush.msra.mxu0 %v224
    %350 = vmatpush.msra.mxu0 %v223
    %351 = vmatpush.msra.mxu0 %v222
    %352 = vmatpush.msra.mxu0 %v221
    %353 = vmatpush.msra.mxu0 %v220
    %354 = vmatpush.msra.mxu0 %v219
    %355 = vmatpush.msra.mxu0 %v218
    %356 = vmatpush.msra.mxu0 %v217
    %357 = vmatpush.msra.mxu0 %v216
    %358 = vmatpush.msra.mxu0 %v215
    %359 = vmatpush.msra.mxu0 %v214
    %360 = vmatpush.msra.mxu0 %v213
    %361 = vmatpush.msra.mxu0 %v212
    %362 = vmatpush.msra.mxu0 %v211
    %363 = vmatpush.msra.mxu0 %v210
    %364 = vmatmul.f32.gmra.mxu0 %v345
    %v365 = vpop.f32.mrf.mxu0
    %v366 = vadd.f32 0.0, %v365
    %367 = vdwg.mxu0
    %v368 = vadd.f32 %v347, %v366
    %v369 = vtanh.pop %v368
    %s370 = scalar_lea.vmem [#allocation2], 48
    %v371 = vld [vmem:[%s370] sm:$0xff]
    %372 = vmatpush.msra.mxu0 %v225
    %373 = vmatpush.msra.mxu0 %v224
    %374 = vmatpush.msra.mxu0 %v223
    %375 = vmatpush.msra.mxu0 %v222
    %376 = vmatpush.msra.mxu0 %v221
    %377 = vmatpush.msra.mxu0 %v220
    %378 = vmatpush.msra.mxu0 %v219
    %379 = vmatpush.msra.mxu0 %v218
    %380 = vmatpush.msra.mxu0 %v217
    %381 = vmatpush.msra.mxu0 %v216
    %382 = vmatpush.msra.mxu0 %v215
    %383 = vmatpush.msra.mxu0 %v214
    %384 = vmatpush.msra.mxu0 %v213
    %385 = vmatpush.msra.mxu0 %v212
    %386 = vmatpush.msra.mxu0 %v211
    %387 = vmatpush.msra.mxu0 %v210
    %388 = vmatmul.f32.gmra.mxu0 %v369
    %v389 = vpop.f32.mrf.mxu0
    %v390 = vadd.f32 0.0, %v389
    %391 = vdwg.mxu0
    %v392 = vadd.f32 %v371, %v390
    %v393 = vtanh.pop %v392
    %v394 = vld [vmem:[#allocation11] sm:$0xff]
    %v395 = vld [vmem:[#allocation11 + $0x8] sm:$0xff]
    %v396 = vld [vmem:[#allocation11 + $0x10] sm:$0xff]
    %v397 = vld [vmem:[#allocation11 + $0x18] sm:$0xff]
    %v398 = vld [vmem:[#allocation11 + $0x20] sm:$0xff]
    %v399 = vld [vmem:[#allocation11 + $0x28] sm:$0xff]
    %v400 = vld [vmem:[#allocation11 + $0x30] sm:$0xff]
    %v401 = vld [vmem:[#allocation11 + $0x38] sm:$0xff]
    %v402 = vld [vmem:[#allocation11 + $0x40] sm:$0xff]
    %v403 = vld [vmem:[#allocation11 + $0x48] sm:$0xff]
    %v404 = vld [vmem:[#allocation11 + $0x50] sm:$0xff]
    %v405 = vld [vmem:[#allocation11 + $0x58] sm:$0xff]
    %v406 = vld [vmem:[#allocation11 + $0x60] sm:$0xff]
    %v407 = vld [vmem:[#allocation11 + $0x68] sm:$0xff]
    %v408 = vld [vmem:[#allocation11 + $0x70] sm:$0xff]
    %v409 = vld [vmem:[#allocation11 + $0x78] sm:$0xff]
    %v410 = vld [vmem:[%s7] sm:$0x1]
    %v412 = vperm.slane %v410, 0
    %414 = vmatpush.msra.mxu0 %v409
    %415 = vmatpush.msra.mxu0 %v408
    %416 = vmatpush.msra.mxu0 %v407
    %417 = vmatpush.msra.mxu0 %v406
    %418 = vmatpush.msra.mxu0 %v405
    %419 = vmatpush.msra.mxu0 %v404
    %420 = vmatpush.msra.mxu0 %v403
    %421 = vmatpush.msra.mxu0 %v402
    %422 = vmatpush.msra.mxu0 %v401
    %423 = vmatpush.msra.mxu0 %v400
    %424 = vmatpush.msra.mxu0 %v399
    %425 = vmatpush.msra.mxu0 %v398
    %426 = vmatpush.msra.mxu0 %v397
    %427 = vmatpush.msra.mxu0 %v396
    %428 = vmatpush.msra.mxu0 %v395
    %429 = vmatpush.msra.mxu0 %v394
    %430 = vmatmul.f32.gmra.mxu0 %v132
    %v431 = vpop.f32.mrf.mxu0
    %v432 = vadd.f32 %v412, %v431
    %433 = vdwg.mxu0
    %v434 = vld [vmem:[#allocation12] sm:$0xff]
    %v435 = vld [vmem:[#allocation12 + $0x8] sm:$0xff]
    %v436 = vld [vmem:[#allocation12 + $0x10] sm:$0xff]
    %v437 = vld [vmem:[#allocation12 + $0x18] sm:$0xff]
    %v438 = vld [vmem:[#allocation12 + $0x20] sm:$0xff]
    %v439 = vld [vmem:[#allocation12 + $0x28] sm:$0xff]
    %v440 = vld [vmem:[#allocation12 + $0x30] sm:$0xff]
    %v441 = vld [vmem:[#allocation12 + $0x38] sm:$0xff]
    %v442 = vld [vmem:[#allocation12 + $0x40] sm:$0xff]
    %v443 = vld [vmem:[#allocation12 + $0x48] sm:$0xff]
    %v444 = vld [vmem:[#allocation12 + $0x50] sm:$0xff]
    %v445 = vld [vmem:[#allocation12 + $0x58] sm:$0xff]
    %v446 = vld [vmem:[#allocation12 + $0x60] sm:$0xff]
    %v447 = vld [vmem:[#allocation12 + $0x68] sm:$0xff]
    %v448 = vld [vmem:[#allocation12 + $0x70] sm:$0xff]
    %v449 = vld [vmem:[#allocation12 + $0x78] sm:$0xff]
    %450 = vmatpush.msra.mxu0 %v449
    %451 = vmatpush.msra.mxu0 %v448
    %452 = vmatpush.msra.mxu0 %v447
    %453 = vmatpush.msra.mxu0 %v446
    %454 = vmatpush.msra.mxu0 %v445
    %455 = vmatpush.msra.mxu0 %v444
    %456 = vmatpush.msra.mxu0 %v443
    %457 = vmatpush.msra.mxu0 %v442
    %458 = vmatpush.msra.mxu0 %v441
    %459 = vmatpush.msra.mxu0 %v440
    %460 = vmatpush.msra.mxu0 %v439
    %461 = vmatpush.msra.mxu0 %v438
    %462 = vmatpush.msra.mxu0 %v437
    %463 = vmatpush.msra.mxu0 %v436
    %464 = vmatpush.msra.mxu0 %v435
    %465 = vmatpush.msra.mxu0 %v434
    %466 = vmatmul.f32.gmra.mxu0 %v393
    %v467 = vpop.f32.mrf.mxu0
    %v468 = vadd.f32 0.0, %v467
    %469 = vdwg.mxu0
    %v470 = vadd.f32 %v432, %v468
    %s471 = scalar_lea.vmem [#allocation2], 56
    %v472 = vld [vmem:[%s471] sm:$0xff]
    %473 = vmatpush.msra.mxu0 %v225
    %474 = vmatpush.msra.mxu0 %v224
    %475 = vmatpush.msra.mxu0 %v223
    %476 = vmatpush.msra.mxu0 %v222
    %477 = vmatpush.msra.mxu0 %v221
    %478 = vmatpush.msra.mxu0 %v220
    %479 = vmatpush.msra.mxu0 %v219
    %480 = vmatpush.msra.mxu0 %v218
    %481 = vmatpush.msra.mxu0 %v217
    %482 = vmatpush.msra.mxu0 %v216
    %483 = vmatpush.msra.mxu0 %v215
    %484 = vmatpush.msra.mxu0 %v214
    %485 = vmatpush.msra.mxu0 %v213
    %486 = vmatpush.msra.mxu0 %v212
    %487 = vmatpush.msra.mxu0 %v211
    %488 = vmatpush.msra.mxu0 %v210
    %489 = vmatmul.f32.gmra.mxu0 %v393
    %v490 = vpop.f32.mrf.mxu0
    %v491 = vadd.f32 0.0, %v490
    %492 = vdwg.mxu0
    %v493 = vadd.f32 %v472, %v491
    %v494 = vtanh.pop %v493
    %495 = vst [vmem:[#allocation14] sm:$0xff] %v470
    %496 = vst [vmem:[#allocation15] sm:$0xff] %v494
    // Predicated region
    $region58: #{tpu_custom_call.1} parent=1 // pred_check
      _
    $region59: #{tpu_custom_call.1} parent=1 // pred_check_branch
      %498 = sbr.rel (0) target = $region61
    $region60: #{tpu_custom_call.1} parent=1 // pred_region
      %500 = vsyncadd [#allocation5], 0
      %s502 = sshll.u32 [#allocation14], 4
      %s503 = int_to_ptr.vmem [resolvable:$true] %s502
      %s504 = sshll.u32 %s8, 4
      %s505 = int_to_ptr.hbm [resolvable:$true] %s504
      %507 = dma.vmem_to_hbm [thread:$0]  %s503, 128, %s505, [#allocation5]
    $region61: #{tpu_custom_call.1} parent=1 // pred_fallthru
      _
    // Predicated region
    $region62: #{tpu_custom_call.1} parent=1 // pred_check
      _
    $region63: #{tpu_custom_call.1} parent=1 // pred_check_branch
      %509 = sbr.rel (0) target = $region65
    $region64: #{tpu_custom_call.1} parent=1 // pred_region
      %511 = vsyncadd [#allocation16], 0
      %s513 = sshll.u32 [#allocation15], 4
      %s514 = int_to_ptr.vmem [resolvable:$true] %s513
      %s515 = sshll.u32 %s9, 4
      %s516 = int_to_ptr.hbm [resolvable:$true] %s515
      %518 = dma.vmem_to_hbm [thread:$0]  %s514, 128, %s516, [#allocation16]
    $region65: #{tpu_custom_call.1} parent=1 // pred_fallthru
      _
    // Predicated region
    $region66: #{tpu_custom_call.1} parent=1 // pred_check
      _
    $region67: #{tpu_custom_call.1} parent=1 // pred_check_branch
      %520 = sbr.rel (0) target = $region69
    $region68: #{tpu_custom_call.1} parent=1 // pred_region
      %522 = dma.done [#allocation5], 128
    $region69: #{tpu_custom_call.1} parent=1 // pred_fallthru
      _
    // Predicated region
    $region70: #{tpu_custom_call.1} parent=1 // pred_check
      _
    $region71: #{tpu_custom_call.1} parent=1 // pred_check_branch
      %524 = sbr.rel (0) target = $region73
    $region72: #{tpu_custom_call.1} parent=1 // pred_region
      %526 = dma.done [#allocation16], 128
    $region73: #{tpu_custom_call.1} parent=1 // pred_fallthru
      _
    %527 = vsyncpa [#allocation4], 1
    %528 = vsyncpa [#allocation7], 1
    %529 = vsyncpa [#allocation10], 1
    %530 = vsyncpa [#allocation13], 1
    %531 = vsyncpa [#allocation5], 1
    %532 = vsyncpa [#allocation16], 1

</llo_original>
